<compile_context>
chip_gen: v5e
topology: v5e:2x2
jax: 0.10.0
libtpu: 0.0.40
codegen_flags: <defaults>
</compile_context>

<pallas_src>
import jax
import jax.numpy as jnp
from jax.experimental import pallas as pl
from jax.experimental.pallas import tpu as pltpu

EPS = 1e-5
NEG_SLOPE = 0.2


def _discriminator_kernel(consts_ref, x_ref, w1_ref, t1_ref, w2_ref, t2_ref,
                          w3_ref, o_ref):
    """One batch tile.

    consts_ref : SMEM f32[C + 2] = [wconv * conv_bn_scale (C entries),
                                    conv_bn_shift, final_bias]
    x_ref      : VMEM f32[C, TB, W]   (lane axis = W)
    w1_ref     : VMEM (W, H)  BN-scale-folded weights, f32 or bf16
    t1_ref     : VMEM f32[1, H]
    w2_ref     : VMEM (H, H)  BN-scale-folded weights, f32 or bf16
    t2_ref     : VMEM f32[1, H]
    w3_ref     : VMEM f32[1, H]
    o_ref      : VMEM f32[TB, 1]
    """
    C = x_ref.shape[0]

    # Conv1d(C -> 1, k=1) with the BN scale pre-folded into the weights:
    # C scalar*matrix FMAs on the VPU (unrolled; C is small and static).
    acc = x_ref[0] * consts_ref[0]
    for c in range(1, C):
        acc = acc + x_ref[c] * consts_ref[c]
    y = jnp.maximum(acc + consts_ref[C], 0.0)                       # (TB, W)

    # Linear(W -> H) (BN scale folded in) + shift + LeakyReLU(0.2)
    h = jnp.dot(y.astype(w1_ref.dtype), w1_ref[...],
                preferred_element_type=jnp.float32)                 # (TB, H)
    h = h + t1_ref[...]
    h = jnp.maximum(h, NEG_SLOPE * h)

    # Linear(H -> H) (BN scale folded in) + shift + LeakyReLU(0.2)
    h = jnp.dot(h.astype(w2_ref.dtype), w2_ref[...],
                preferred_element_type=jnp.float32)                 # (TB, H)
    h = h + t2_ref[...]
    h = jnp.maximum(h, NEG_SLOPE * h)

    # Dropout(0.2) is identity at inference time.
    # TODO(synk): training-mode dropout (random mask) is not implemented.
    # Final Linear(H -> 1): lane reduce instead of an N=1 MXU matmul.
    o = jnp.sum(h * w3_ref[...], axis=-1, keepdims=True) + consts_ref[C + 1]
    o_ref[...] = o.astype(o_ref.dtype)


def _round_up(n, m):
    return ((n + m - 1) // m) * m


def init_params(key, window_size, input_channel, hidden_size):
    ks = jax.random.split(key, 8)
    p = {}
    # Conv1d(C -> 1, k=1): torch weight (1, C, 1) -> stored as (1, C); bias (1,)
    p["wconv"] = 0.2 * jax.random.normal(ks[0], (1, input_channel), jnp.float32)
    p["bconv"] = 0.1 * jax.random.normal(ks[1], (1,), jnp.float32)
    # BatchNorm1d(1): deterministic, non-trivial running stats
    p["g0"] = jnp.array([1.1], jnp.float32)
    p["be0"] = jnp.array([0.05], jnp.float32)
    p["m0"] = jnp.array([0.02], jnp.float32)
    p["v0"] = jnp.array([0.9], jnp.float32)
    # Linear(W -> H) stored (in, out)
    p["w1"] = 0.2 * jax.random.normal(ks[2], (window_size, hidden_size), jnp.float32)
    p["b1"] = 0.1 * jax.random.normal(ks[3], (hidden_size,), jnp.float32)
    h_idx = jnp.arange(hidden_size, dtype=jnp.float32)
    p["g1"] = 1.0 + 0.01 * h_idx
    p["be1"] = 0.02 * h_idx
    p["m1"] = 0.005 * h_idx
    p["v1"] = 1.0 + 0.02 * h_idx
    # Linear(H -> H)
    p["w2"] = 0.2 * jax.random.normal(ks[4], (hidden_size, hidden_size), jnp.float32)
    p["b2"] = 0.1 * jax.random.normal(ks[5], (hidden_size,), jnp.float32)
    p["g2"] = 1.0 - 0.005 * h_idx
    p["be2"] = -0.01 * h_idx
    p["m2"] = 0.003 * h_idx
    p["v2"] = 1.0 + 0.01 * h_idx
    # Linear(H -> 1)
    p["w3"] = 0.2 * jax.random.normal(ks[6], (hidden_size,), jnp.float32)
    p["b3"] = 0.1 * jax.random.normal(ks[7], (1,), jnp.float32)
    return p


def _fold_params(params, use_bf16):
    """Plain-JAX prep: fold BatchNorm stats + biases into weights / shifts."""
    a0 = params["g0"] / jnp.sqrt(params["v0"] + EPS)                    # (1,)
    b0 = params["be0"] + a0 * (params["bconv"] - params["m0"])          # (1,)
    wconv_scaled = (params["wconv"].reshape(-1) * a0).astype(jnp.float32)   # (C,)

    s1 = params["g1"] / jnp.sqrt(params["v1"] + EPS)
    t1 = params["be1"] + s1 * (params["b1"] - params["m1"])
    w1f = params["w1"] * s1[None, :]

    s2 = params["g2"] / jnp.sqrt(params["v2"] + EPS)
    t2 = params["be2"] + s2 * (params["b2"] - params["m2"])
    w2f = params["w2"] * s2[None, :]

    mm_dtype = jnp.bfloat16 if use_bf16 else jnp.float32
    H = w1f.shape[1]
    consts = jnp.concatenate(
        [wconv_scaled, b0.reshape(1), params["b3"].reshape(1)]).astype(jnp.float32)
    return (consts,
            w1f.astype(mm_dtype), t1.reshape(1, H).astype(jnp.float32),
            w2f.astype(mm_dtype), t2.reshape(1, H).astype(jnp.float32),
            params["w3"].reshape(1, H).astype(jnp.float32))


def data_discriminator_forward(x, params, *, use_bf16=True, tile_b_max=512):
    """x: (B, 1, C, W) float32  ->  (B, 1) float32."""
    x = jnp.squeeze(x, axis=1).astype(jnp.float32)                  # (B, C, W)
    B, C, W = x.shape
    H = params["w1"].shape[1]

    consts, w1f, t1, w2f, t2, w3 = _fold_params(params, use_bf16)

    # Batch tiling: tile must be a multiple of 8 (sublane constraint on the
    # x / output blocks); pad B up to a multiple of the tile.
    tile_b = min(_round_up(B, 8), tile_b_max)
    B_pad = _round_up(B, tile_b)
    if B_pad != B:
        x = jnp.pad(x, ((0, B_pad - B), (0, 0), (0, 0)))
    x_t = jnp.transpose(x, (1, 0, 2))                               # (C, B_pad, W)

    grid = (B_pad // tile_b,)

    def const_spec(*shape):
        return pl.BlockSpec(shape, lambda i: (0,) * len(shape))

    itemsize = 2 if use_bf16 else 4
    weight_bytes = ((w1f.size + w2f.size) * itemsize
                    + (t1.size + t2.size + w3.size) * 4)
    tile_bytes = C * tile_b * W * 4 + tile_b * 4
    # Assume everything double-buffered + 4 MiB headroom; clamp below v7x VMEM.
    vmem_limit = int(min(2 * (weight_bytes + tile_bytes) + (4 << 20), 48 << 20))

    flops = 2 * B_pad * (C * W + W * H + H * H + H)
    bytes_accessed = x_t.size * 4 + weight_bytes + (C + 2) * 4 + B_pad * 4

    out = pl.pallas_call(
        _discriminator_kernel,
        out_shape=jax.ShapeDtypeStruct((B_pad, 1), jnp.float32),
        grid=grid,
        in_specs=[
            pl.BlockSpec(memory_space=pltpu.MemorySpace.SMEM),      # consts
            pl.BlockSpec((C, tile_b, W), lambda i: (0, i, 0)),      # x tile
            const_spec(W, H),                                       # w1 (folded)
            const_spec(1, H),                                       # t1
            const_spec(H, H),                                       # w2 (folded)
            const_spec(1, H),                                       # t2
            const_spec(1, H),                                       # w3
        ],
        out_specs=pl.BlockSpec((tile_b, 1), lambda i: (i, 0)),
        compiler_params=pltpu.CompilerParams(
            dimension_semantics=("parallel",),
            vmem_limit_bytes=vmem_limit),
        cost_estimate=pl.CostEstimate(
            flops=int(flops), transcendentals=0,
            bytes_accessed=int(bytes_accessed)),
    )(consts, x_t, w1f, t1, w2f, t2, w3)

    return out[:B]


def data_discriminator_reference(x, params):
    """Pure-JAX reference of the PyTorch forward (inference mode)."""
    x = jnp.squeeze(x, axis=1).astype(jnp.float32)                  # (B, C, W)
    # Conv1d(k=1) + bias
    y = jnp.einsum("bcw,oc->bow", x, params["wconv"]) + params["bconv"][None, :, None]
    # BatchNorm1d(1) + ReLU
    y = params["g0"] * (y - params["m0"]) / jnp.sqrt(params["v0"] + EPS) + params["be0"]
    y = jnp.maximum(y, 0.0)
    y = jnp.squeeze(y, axis=1)                                      # (B, W)

    def lin_bn_lrelu(z, w, b, g, be, m, v):
        z = z @ w + b
        z = g * (z - m) / jnp.sqrt(v + EPS) + be
        return jnp.where(z > 0, z, NEG_SLOPE * z)

    h = lin_bn_lrelu(y, params["w1"], params["b1"], params["g1"], params["be1"],
                     params["m1"], params["v1"])
    h = lin_bn_lrelu(h, params["w2"], params["b2"], params["g2"], params["be2"],
                     params["m2"], params["v2"])
    # Dropout(0.2): identity in eval
    return h @ params["w3"].reshape(-1, 1) + params["b3"]


if __name__ == "__main__":
    B, C, W, H = 8, 4, 16, 32       # batch, input_channel, window_size, hidden_size
    key = jax.random.PRNGKey(0)
    k_x, k_p = jax.random.split(key)
    x = jax.random.normal(k_x, (B, 1, C, W), jnp.float32)
    params = init_params(k_p, window_size=W, input_channel=C, hidden_size=H)

    ref = data_discriminator_reference(x, params)

    # Full-f32 path: tight check against the PyTorch-semantics reference.
    out_f32 = jax.block_until_ready(
        data_discriminator_forward(x, params, use_bf16=False))
    assert out_f32.shape == (B, 1), out_f32.shape
    assert jnp.allclose(out_f32, ref, atol=1e-4, rtol=1e-4), (out_f32, ref)

    # Default bf16-weight path (matmul operands in bf16, f32 accumulation):
    # low-order bits differ from the f32 reference, hence the looser tolerance.
    out = jax.block_until_ready(data_discriminator_forward(x, params))
    assert out.shape == (B, 1), out.shape
    assert jnp.allclose(out, ref, atol=5e-2, rtol=5e-2), (out, ref)

    print("KERNEL_OK")
</pallas_src>

<mosaic_0001>
module attributes {stable_mosaic.version = 11 : i64} {
  func.func @_discriminator_kernel(%arg0: i32, %arg1: memref<6xf32, #tpu.memory_space<smem>>, %arg2: memref<4x8x16xf32, #tpu.memory_space<vmem>>, %arg3: memref<16x32xf32, #tpu.memory_space<vmem>>, %arg4: memref<1x32xf32, #tpu.memory_space<vmem>>, %arg5: memref<32x32xf32, #tpu.memory_space<vmem>>, %arg6: memref<1x32xf32, #tpu.memory_space<vmem>>, %arg7: memref<1x32xf32, #tpu.memory_space<vmem>>, %arg8: memref<8x1xf32, #tpu.memory_space<vmem>>) attributes {dimension_semantics = [#tpu.dimension_semantics<parallel>], iteration_bounds = array<i64: 1>, scalar_prefetch = 0 : i64, scratch_operands = 0 : i64, tpu.core_type = #tpu.core_type<tc>, window_params = [{transform_indices = @transform_0, window_bounds = array<i64: 6>}, {transform_indices = @transform_1, window_bounds = array<i64: 4, 8, 16>}, {pipeline_mode = #tpu.pipeline_mode<synchronous>, transform_indices = @transform_2, window_bounds = array<i64: 16, 32>}, {pipeline_mode = #tpu.pipeline_mode<synchronous>, transform_indices = @transform_3, window_bounds = array<i64: 1, 32>}, {pipeline_mode = #tpu.pipeline_mode<synchronous>, transform_indices = @transform_4, window_bounds = array<i64: 32, 32>}, {pipeline_mode = #tpu.pipeline_mode<synchronous>, transform_indices = @transform_5, window_bounds = array<i64: 1, 32>}, {pipeline_mode = #tpu.pipeline_mode<synchronous>, transform_indices = @transform_6, window_bounds = array<i64: 1, 32>}, {transform_indices = @transform_7, window_bounds = array<i64: 8, 1>}]} {
    %c0 = arith.constant 0 : index
    %c0_0 = arith.constant 0 : index
    %c0_1 = arith.constant 0 : index
    %0 = vector.load %arg2[%c0, %c0_0, %c0_1] : memref<4x8x16xf32, #tpu.memory_space<vmem>>, vector<1x8x16xf32>
    %1 = vector.shape_cast %0 : vector<1x8x16xf32> to vector<8x16xf32>
    %c0_2 = arith.constant 0 : index
    %2 = memref.load %arg1[%c0_2] : memref<6xf32, #tpu.memory_space<smem>>
    %3 = vector.broadcast %2 : f32 to vector<8x16xf32>
    %4 = arith.mulf %1, %3 : vector<8x16xf32>
    %c1 = arith.constant 1 : index
    %c0_3 = arith.constant 0 : index
    %c0_4 = arith.constant 0 : index
    %5 = vector.load %arg2[%c1, %c0_3, %c0_4] : memref<4x8x16xf32, #tpu.memory_space<vmem>>, vector<1x8x16xf32>
    %6 = vector.shape_cast %5 : vector<1x8x16xf32> to vector<8x16xf32>
    %c1_5 = arith.constant 1 : index
    %7 = memref.load %arg1[%c1_5] : memref<6xf32, #tpu.memory_space<smem>>
    %8 = vector.broadcast %7 : f32 to vector<8x16xf32>
    %9 = arith.mulf %6, %8 : vector<8x16xf32>
    %10 = arith.addf %4, %9 : vector<8x16xf32>
    %c2 = arith.constant 2 : index
    %c0_6 = arith.constant 0 : index
    %c0_7 = arith.constant 0 : index
    %11 = vector.load %arg2[%c2, %c0_6, %c0_7] : memref<4x8x16xf32, #tpu.memory_space<vmem>>, vector<1x8x16xf32>
    %12 = vector.shape_cast %11 : vector<1x8x16xf32> to vector<8x16xf32>
    %c2_8 = arith.constant 2 : index
    %13 = memref.load %arg1[%c2_8] : memref<6xf32, #tpu.memory_space<smem>>
    %14 = vector.broadcast %13 : f32 to vector<8x16xf32>
    %15 = arith.mulf %12, %14 : vector<8x16xf32>
    %16 = arith.addf %10, %15 : vector<8x16xf32>
    %c3 = arith.constant 3 : index
    %c0_9 = arith.constant 0 : index
    %c0_10 = arith.constant 0 : index
    %17 = vector.load %arg2[%c3, %c0_9, %c0_10] : memref<4x8x16xf32, #tpu.memory_space<vmem>>, vector<1x8x16xf32>
    %18 = vector.shape_cast %17 : vector<1x8x16xf32> to vector<8x16xf32>
    %c3_11 = arith.constant 3 : index
    %19 = memref.load %arg1[%c3_11] : memref<6xf32, #tpu.memory_space<smem>>
    %20 = vector.broadcast %19 : f32 to vector<8x16xf32>
    %21 = arith.mulf %18, %20 : vector<8x16xf32>
    %22 = arith.addf %16, %21 : vector<8x16xf32>
    %c4 = arith.constant 4 : index
    %23 = memref.load %arg1[%c4] : memref<6xf32, #tpu.memory_space<smem>>
    %24 = vector.broadcast %23 : f32 to vector<8x16xf32>
    %25 = arith.addf %22, %24 : vector<8x16xf32>
    %cst = arith.constant 0.000000e+00 : f32
    %26 = vector.broadcast %cst : f32 to vector<8x16xf32>
    %27 = arith.maximumf %25, %26 : vector<8x16xf32>
    %c0_12 = arith.constant 0 : index
    %c0_13 = arith.constant 0 : index
    %28 = vector.load %arg3[%c0_12, %c0_13] : memref<16x32xf32, #tpu.memory_space<vmem>>, vector<16x32xf32>
    %cst_14 = arith.constant dense<0.000000e+00> : vector<8x32xf32>
    %29 = tpu.matmul %27, %28, %cst_14 {dimension_numbers = #tpu.dot_dimension_numbers<[1], [0], [0], [1], [0, 0, 1, 1], [], []>} : vector<8x16xf32>, vector<16x32xf32>, vector<8x32xf32> -> vector<8x32xf32>
    %c0_15 = arith.constant 0 : index
    %c0_16 = arith.constant 0 : index
    %30 = vector.load %arg4[%c0_15, %c0_16] : memref<1x32xf32, #tpu.memory_space<vmem>>, vector<1x32xf32>
    %31 = vector.broadcast %30 : vector<1x32xf32> to vector<8x32xf32>
    %32 = arith.addf %29, %31 : vector<8x32xf32>
    %cst_17 = arith.constant 2.000000e-01 : f32
    %33 = vector.broadcast %cst_17 : f32 to vector<8x32xf32>
    %34 = arith.mulf %33, %32 : vector<8x32xf32>
    %35 = arith.maximumf %32, %34 : vector<8x32xf32>
    %c0_18 = arith.constant 0 : index
    %c0_19 = arith.constant 0 : index
    %36 = vector.load %arg5[%c0_18, %c0_19] : memref<32x32xf32, #tpu.memory_space<vmem>>, vector<32x32xf32>
    %cst_20 = arith.constant dense<0.000000e+00> : vector<8x32xf32>
    %37 = tpu.matmul %35, %36, %cst_20 {dimension_numbers = #tpu.dot_dimension_numbers<[1], [0], [0], [1], [0, 0, 1, 1], [], []>} : vector<8x32xf32>, vector<32x32xf32>, vector<8x32xf32> -> vector<8x32xf32>
    %c0_21 = arith.constant 0 : index
    %c0_22 = arith.constant 0 : index
    %38 = vector.load %arg6[%c0_21, %c0_22] : memref<1x32xf32, #tpu.memory_space<vmem>>, vector<1x32xf32>
    %39 = vector.broadcast %38 : vector<1x32xf32> to vector<8x32xf32>
    %40 = arith.addf %37, %39 : vector<8x32xf32>
    %cst_23 = arith.constant 2.000000e-01 : f32
    %41 = vector.broadcast %cst_23 : f32 to vector<8x32xf32>
    %42 = arith.mulf %41, %40 : vector<8x32xf32>
    %43 = arith.maximumf %40, %42 : vector<8x32xf32>
    %c0_24 = arith.constant 0 : index
    %c0_25 = arith.constant 0 : index
    %44 = vector.load %arg7[%c0_24, %c0_25] : memref<1x32xf32, #tpu.memory_space<vmem>>, vector<1x32xf32>
    %45 = vector.broadcast %44 : vector<1x32xf32> to vector<8x32xf32>
    %46 = arith.mulf %43, %45 : vector<8x32xf32>
    %cst_26 = arith.constant dense<0.000000e+00> : vector<8xf32>
    %47 = vector.multi_reduction <add>, %46, %cst_26 [1] : vector<8x32xf32> to vector<8xf32>
    %48 = vector.shape_cast %47 : vector<8xf32> to vector<8x1xf32>
    %c5 = arith.constant 5 : index
    %49 = memref.load %arg1[%c5] : memref<6xf32, #tpu.memory_space<smem>>
    %50 = vector.broadcast %49 : f32 to vector<8x1xf32>
    %51 = arith.addf %48, %50 : vector<8x1xf32>
    %c0_27 = arith.constant 0 : index
    %c0_28 = arith.constant 0 : index
    %52 = vector.load %arg8[%c0_27, %c0_28] : memref<8x1xf32, #tpu.memory_space<vmem>>, vector<8x1xf32>
    tpu.vector_store %arg8[%c0_27, %c0_28], %51 {strides = array<i32>} : memref<8x1xf32, #tpu.memory_space<vmem>>, vector<8x1xf32>,
    return
  }
  func.func @transform_0(%arg0: i32) -> i32 {
    %c0_i32 = arith.constant 0 : i32
    %c0_i32_0 = arith.constant 0 : i32
    return %c0_i32 : i32
  }
  func.func @transform_1(%arg0: i32) -> (i32, i32, i32) {
    %c0_i32 = arith.constant 0 : i32
    %c0_i32_0 = arith.constant 0 : i32
    %c0_i32_1 = arith.constant 0 : i32
    return %c0_i32, %arg0, %c0_i32_0 : i32, i32, i32
  }
  func.func @transform_2(%arg0: i32) -> (i32, i32) {
    %c0_i32 = arith.constant 0 : i32
    %c0_i32_0 = arith.constant 0 : i32
    %c0_i32_1 = arith.constant 0 : i32
    return %c0_i32, %c0_i32_0 : i32, i32
  }
  func.func @transform_3(%arg0: i32) -> (i32, i32) {
    %c0_i32 = arith.constant 0 : i32
    %c0_i32_0 = arith.constant 0 : i32
    %c0_i32_1 = arith.constant 0 : i32
    return %c0_i32, %c0_i32_0 : i32, i32
  }
  func.func @transform_4(%arg0: i32) -> (i32, i32) {
    %c0_i32 = arith.constant 0 : i32
    %c0_i32_0 = arith.constant 0 : i32
    %c0_i32_1 = arith.constant 0 : i32
    return %c0_i32, %c0_i32_0 : i32, i32
  }
  func.func @transform_5(%arg0: i32) -> (i32, i32) {
    %c0_i32 = arith.constant 0 : i32
    %c0_i32_0 = arith.constant 0 : i32
    %c0_i32_1 = arith.constant 0 : i32
    return %c0_i32, %c0_i32_0 : i32, i32
  }
  func.func @transform_6(%arg0: i32) -> (i32, i32) {
    %c0_i32 = arith.constant 0 : i32
    %c0_i32_0 = arith.constant 0 : i32
    %c0_i32_1 = arith.constant 0 : i32
    return %c0_i32, %c0_i32_0 : i32, i32
  }
  func.func @transform_7(%arg0: i32) -> (i32, i32) {
    %c0_i32 = arith.constant 0 : i32
    %c0_i32_0 = arith.constant 0 : i32
    return %arg0, %c0_i32 : i32, i32
  }
}

</mosaic_0001>

<llo_original>
// kernel: tpu_custom_call.1
$region0: #{tpu_custom_call.1}
  #allocation0 [shape = 'u32[]', space=smem, size = 0x4, offset = 0x4, fixed_abs, tag = 'smem constant byte address 0x4 - core index']
  #allocation1 [shape = 'u32[72,128]{1,0:T(1,128)}', space=vmem, size = 0x9000, scoped, tag = 'internal scratch']
  %s0 = inlined_call_operand.hbm [shape: f32[6], index: 0, kind: input, shape index: {}]
  %s1 = inlined_call_operand.hbm [shape: f32[4,8,16], index: 1, kind: input, shape index: {}]
  %s2 = inlined_call_operand.hbm [shape: f32[16,32], index: 2, kind: input, shape index: {}]
  %s3 = inlined_call_operand.vmem [shape: f32[1,32], index: 3, kind: input, shape index: {}]
  %s4 = inlined_call_operand.hbm [shape: f32[32,32], index: 4, kind: input, shape index: {}]
  %s5 = inlined_call_operand.vmem [shape: f32[1,32], index: 5, kind: input, shape index: {}]
  %s6 = inlined_call_operand.vmem [shape: f32[1,32], index: 6, kind: input, shape index: {}]
  %s7 = inlined_call_operand.vmem [shape: f32[8,1], index: 7, kind: output, shape index: {}]
  %s8 = sld [smem:[#allocation0]]
  $region54: #{tpu_custom_call.1} parent=0
    _
  %s10 = ssub.s32 1, %s8
  %s11 = scalar_select 0, %s10, %s8
  $region1: #{tpu_custom_call.1} parent=0
    #allocation2 [shape = 'u8[512]{0}', space=smem, size = 0x200, scoped, tag = 'input window, operand 0, single buffered']
    #allocation3 [shape = 's32[1]{0}', space=sflag, size = 0x4, scoped, tag = 'scoped memory for tpu_custom_call.1']
    #allocation4 [shape = 's32[1]{0}', space=sflag, size = 0x4, scoped, tag = 'scoped memory for tpu_custom_call.1']
    #allocation5 [shape = 'u8[16384]{0}', space=vmem, size = 0x4000, scoped, tag = 'input window, operand 1, single buffered']
    #allocation6 [shape = 'u8[8192]{0}', space=vmem, size = 0x2000, scoped, tag = 'input window, operand 2, single buffered']
    #allocation7 [shape = 's32[1]{0}', space=sflag, size = 0x4, scoped, tag = 'scoped memory for tpu_custom_call.1']
    #allocation8 [shape = 'u8[16384]{0}', space=vmem, size = 0x4000, scoped, tag = 'input window, operand 4, single buffered']
    %12 = vsyncpa [#allocation4], 0
    %13 = vsyncpa [#allocation3], 0
    %14 = vsyncpa [#allocation7], 0
    // Predicated region
    $region2: #{tpu_custom_call.1} parent=1 // pred_check
      _
    $region3: #{tpu_custom_call.1} parent=1 // pred_check_branch
      %16 = sbr.rel (0) target = $region5
    $region4: #{tpu_custom_call.1} parent=1 // pred_region
      %18 = vsyncadd [#allocation4], 0
      %s20 = sshll.u32 %s0, 4
      %s21 = int_to_ptr.hbm [resolvable:$true] %s20
      %23 = dma.hbm_to_smem %s21, 16, [#allocation2], [#allocation4]
    $region5: #{tpu_custom_call.1} parent=1 // pred_fallthru
      _
    // Predicated region
    $region6: #{tpu_custom_call.1} parent=1 // pred_check
      _
    $region7: #{tpu_custom_call.1} parent=1 // pred_check_branch
      %25 = sbr.rel (0) target = $region9
    $region8: #{tpu_custom_call.1} parent=1 // pred_region
      %27 = vsyncadd [#allocation3], 0
      %s28 = sshll.u32 %s1, 4
      %s29 = int_to_ptr.hbm [resolvable:$true] %s28
      %s30 = sshll.u32 [#allocation5], 4
      %s31 = int_to_ptr.vmem [resolvable:$true] %s30
      %36 = dma.hbm_to_vmem [thread:$0]  %s29, 512, %s31, [#allocation3], 128, 128, 8
    $region9: #{tpu_custom_call.1} parent=1 // pred_fallthru
      _
    // Predicated region
    $region10: #{tpu_custom_call.1} parent=1 // pred_check
      _
    $region11: #{tpu_custom_call.1} parent=1 // pred_check_branch
      %38 = sbr.rel (0) target = $region13
    $region12: #{tpu_custom_call.1} parent=1 // pred_region
      %40 = vsyncadd [#allocation7], 0
      %s41 = sshll.u32 %s2, 4
      %s42 = int_to_ptr.hbm [resolvable:$true] %s41
      %s43 = sshll.u32 [#allocation6], 4
      %s44 = int_to_ptr.vmem [resolvable:$true] %s43
      %49 = dma.hbm_to_vmem [thread:$0]  %s42, 256, %s44, [#allocation7], 128, 128, 8
    $region13: #{tpu_custom_call.1} parent=1 // pred_fallthru
      _
    // Predicated region
    $region14: #{tpu_custom_call.1} parent=1 // pred_check
      _
    $region15: #{tpu_custom_call.1} parent=1 // pred_check_branch
      %51 = sbr.rel (0) target = $region17
    $region16: #{tpu_custom_call.1} parent=1 // pred_region
      _
    $region17: #{tpu_custom_call.1} parent=1 // pred_fallthru
      _
    // Predicated region
    $region18: #{tpu_custom_call.1} parent=1 // pred_check
      _
    $region19: #{tpu_custom_call.1} parent=1 // pred_check_branch
      %53 = sbr.rel (0) target = $region21
    $region20: #{tpu_custom_call.1} parent=1 // pred_region
      %55 = vsyncadd [#allocation7], 0
      %s56 = sshll.u32 %s4, 4
      %s57 = int_to_ptr.hbm [resolvable:$true] %s56
      %s58 = sshll.u32 [#allocation8], 4
      %s59 = int_to_ptr.vmem [resolvable:$true] %s58
      %64 = dma.hbm_to_vmem [thread:$0]  %s57, 512, %s59, [#allocation7], 128, 128, 8
    $region21: #{tpu_custom_call.1} parent=1 // pred_fallthru
      _
    // Predicated region
    $region22: #{tpu_custom_call.1} parent=1 // pred_check
      _
    $region23: #{tpu_custom_call.1} parent=1 // pred_check_branch
      %66 = sbr.rel (0) target = $region25
    $region24: #{tpu_custom_call.1} parent=1 // pred_region
      _
    $region25: #{tpu_custom_call.1} parent=1 // pred_fallthru
      _
    // Predicated region
    $region26: #{tpu_custom_call.1} parent=1 // pred_check
      _
    $region27: #{tpu_custom_call.1} parent=1 // pred_check_branch
      %68 = sbr.rel (0) target = $region29
    $region28: #{tpu_custom_call.1} parent=1 // pred_region
      _
    $region29: #{tpu_custom_call.1} parent=1 // pred_fallthru
      _
    // Predicated region
    $region30: #{tpu_custom_call.1} parent=1 // pred_check
      _
    $region31: #{tpu_custom_call.1} parent=1 // pred_check_branch
      %70 = sbr.rel (0) target = $region33
    $region32: #{tpu_custom_call.1} parent=1 // pred_region
      %72 = dma.done [#allocation4], 16
    $region33: #{tpu_custom_call.1} parent=1 // pred_fallthru
      _
    // Predicated region
    $region34: #{tpu_custom_call.1} parent=1 // pred_check
      _
    $region35: #{tpu_custom_call.1} parent=1 // pred_check_branch
      %74 = sbr.rel (0) target = $region37
    $region36: #{tpu_custom_call.1} parent=1 // pred_region
      %76 = dma.done [#allocation3], 512
    $region37: #{tpu_custom_call.1} parent=1 // pred_fallthru
      _
    // Predicated region
    $region38: #{tpu_custom_call.1} parent=1 // pred_check
      _
    $region39: #{tpu_custom_call.1} parent=1 // pred_check_branch
      %78 = sbr.rel (0) target = $region41
    $region40: #{tpu_custom_call.1} parent=1 // pred_region
      %80 = dma.done [#allocation7], 256
    $region41: #{tpu_custom_call.1} parent=1 // pred_fallthru
      _
    // Predicated region
    $region42: #{tpu_custom_call.1} parent=1 // pred_check
      _
    $region43: #{tpu_custom_call.1} parent=1 // pred_check_branch
      %82 = sbr.rel (0) target = $region45
    $region44: #{tpu_custom_call.1} parent=1 // pred_region
      %84 = dma.done [#allocation7], 512
    $region45: #{tpu_custom_call.1} parent=1 // pred_fallthru
      _
    %85 = sfence
    %v86 = vld [vmem:[#allocation5] sm:$0xff]
    %s87 = sld [smem:[#allocation2]]
    %v88 = vstv %s87
    %v89 = vmul.f32 %v86, %v88
    %s90 = scalar_lea.vmem [#allocation5], 8
    %v91 = vld [vmem:[%s90] sm:$0xff]
    %s92 = sld [smem:[#allocation2 + $0x1]]
    %v93 = vstv %s92
    %v94 = vmul.f32 %v91, %v93
    %v95 = vadd.f32 %v89, %v94
    %s96 = scalar_lea.vmem [#allocation5], 16
    %v97 = vld [vmem:[%s96] sm:$0xff]
    %s98 = sld [smem:[#allocation2 + $0x2]]
    %v99 = vstv %s98
    %v100 = vmul.f32 %v97, %v99
    %v101 = vadd.f32 %v95, %v100
    %s102 = scalar_lea.vmem [#allocation5], 24
    %v103 = vld [vmem:[%s102] sm:$0xff]
    %s104 = sld [smem:[#allocation2 + $0x3]]
    %v105 = vstv %s104
    %v106 = vmul.f32 %v103, %v105
    %v107 = vadd.f32 %v101, %v106
    %s108 = sld [smem:[#allocation2 + $0x4]]
    %v109 = vstv %s108
    %v110 = vadd.f32 %v107, %v109
    %v111 = vmax.f32 %v110, 0.0
    %v112 = vld [vmem:[#allocation6] sm:$0xff]
    %v113 = vld [vmem:[#allocation6 + $0x8] sm:$0xff]
    %v114 = vld [vmem:[%s3] sm:$0x1]
    %v116 = vperm.slane %v114, 0
    %vm118 = vcmask 130048
    %v120 = vsel %vm118, %v111, 0
    %122 = vmatpush.msra.mxu0 0.0
    %123 = vmatpush.msra.mxu0 0.0
    %124 = vmatpush.msra.mxu0 0.0
    %125 = vmatpush.msra.mxu0 0.0
    %126 = vmatpush.msra.mxu0 0.0
    %127 = vmatpush.msra.mxu0 0.0
    %128 = vmatpush.msra.mxu0 0.0
    %129 = vmatpush.msra.mxu0 0.0
    %130 = vmatpush.msra.mxu0 0.0
    %131 = vmatpush.msra.mxu0 0.0
    %132 = vmatpush.msra.mxu0 0.0
    %133 = vmatpush.msra.mxu0 0.0
    %134 = vmatpush.msra.mxu0 0.0
    %135 = vmatpush.msra.mxu0 0.0
    %136 = vmatpush.msra.mxu0 %v113
    %137 = vmatpush.msra.mxu0 %v112
    %138 = vmatmul.f32.gmra.mxu0 %v120
    %v139 = vpop.f32.mrf.mxu0
    %v140 = vadd.f32 %v116, %v139
    %141 = vdwg.mxu0
    %v142 = vmul.f32 %v140, 0.2
    %v143 = vmax.f32 %v140, %v142
    %v144 = vld [vmem:[#allocation8] sm:$0xff]
    %v145 = vld [vmem:[#allocation8 + $0x8] sm:$0xff]
    %v146 = vld [vmem:[#allocation8 + $0x10] sm:$0xff]
    %v147 = vld [vmem:[#allocation8 + $0x18] sm:$0xff]
    %v148 = vld [vmem:[%s5] sm:$0x1]
    %v150 = vperm.slane %v148, 0
    %vm152 = vcmask 261120
    %v154 = vsel %vm152, %v143, 0
    %156 = vmatpush.msra.mxu0 0.0
    %157 = vmatpush.msra.mxu0 0.0
    %158 = vmatpush.msra.mxu0 0.0
    %159 = vmatpush.msra.mxu0 0.0
    %160 = vmatpush.msra.mxu0 0.0
    %161 = vmatpush.msra.mxu0 0.0
    %162 = vmatpush.msra.mxu0 0.0
    %163 = vmatpush.msra.mxu0 0.0
    %164 = vmatpush.msra.mxu0 0.0
    %165 = vmatpush.msra.mxu0 0.0
    %166 = vmatpush.msra.mxu0 0.0
    %167 = vmatpush.msra.mxu0 0.0
    %168 = vmatpush.msra.mxu0 %v147
    %169 = vmatpush.msra.mxu0 %v146
    %170 = vmatpush.msra.mxu0 %v145
    %171 = vmatpush.msra.mxu0 %v144
    %172 = vmatmul.f32.gmra.mxu0 %v154
    %v173 = vpop.f32.mrf.mxu0
    %v174 = vadd.f32 %v150, %v173
    %175 = vdwg.mxu0
    %v176 = vmul.f32 %v174, 0.2
    %v177 = vmax.f32 %v174, %v176
    %v178 = vld [vmem:[%s6] sm:$0x1]
    %v180 = vperm.slane %v178, 0
    %v182 = vmul.f32 %v177, %v180
    %v183 = vsel %vm152, %v182, 0.0
    %184 = vadd.xlane.f32.xlu0 %v183
    %v185 = vpop.xlane.xlu0 %184
    %s186 = sld [smem:[#allocation2 + $0x5]]
    %v187 = vstv %s186
    %v188 = vadd.f32 %v185, %v187
    %vm189 = vcmask 7168
    %190 = vst.msk [vmem:[%s7] sm:$0xff] %vm189, %v188
    // Predicated region
    $region46: #{tpu_custom_call.1} parent=1 // pred_check
      _
    $region47: #{tpu_custom_call.1} parent=1 // pred_check_branch
      %192 = sbr.rel (0) target = $region49
    $region48: #{tpu_custom_call.1} parent=1 // pred_region
      _
    $region49: #{tpu_custom_call.1} parent=1 // pred_fallthru
      _
    // Predicated region
    $region50: #{tpu_custom_call.1} parent=1 // pred_check
      _
    $region51: #{tpu_custom_call.1} parent=1 // pred_check_branch
      %194 = sbr.rel (0) target = $region53
    $region52: #{tpu_custom_call.1} parent=1 // pred_region
      _
    $region53: #{tpu_custom_call.1} parent=1 // pred_fallthru
      _
    %195 = vsyncpa [#allocation3], 1
    %196 = vsyncpa [#allocation7], 1
    %197 = vsyncpa [#allocation4], 1

</llo_original>
